<compile_context>
chip_gen: v7x
topology: tpu7x:2x2x1
jax: 0.10.0
libtpu: 0.0.40
codegen_flags: <defaults>
</compile_context>

<pallas_src>
import functools

import jax
import jax.numpy as jnp
from jax.experimental import pallas as pl
from jax.experimental.pallas import tpu as pltpu

LN_EPS = 1e-5
_VMEM_LIMIT = 48 * 1024 * 1024  # explicit scoped-VMEM budget (safe on v5e/v6e/v7x)


def _layernorm(x, gamma, beta):
    mean = jnp.mean(x, axis=-1, keepdims=True)
    var = jnp.mean((x - mean) ** 2, axis=-1, keepdims=True)
    return (x - mean) * jax.lax.rsqrt(var + LN_EPS) * gamma + beta


def _round_up(x, m):
    return (x + m - 1) // m * m


def _tile_and_pad(dim, max_tile):
    """Pick a lane-aligned tile (multiple of 128) and the padded dim size."""
    padded = _round_up(dim, 128)
    if padded <= max_tile:
        return padded, padded
    tile = max(128, (max_tile // 128) * 128)
    return tile, _round_up(dim, tile)


# ---------------------------------------------------------------------------
# Stage 1:  lat1 = LN1( (adj.T @ embeds) @ W^T )                 shape (E, H)
# grid = (E_tiles, N_tiles); axis 1 is the node-contraction (reduction) axis.
# ---------------------------------------------------------------------------
def _stage1_kernel(adj_ref, emb_ref, wt_ref, g1_ref, b1_ref, out_ref, acc_ref):
    k = pl.program_id(1)

    @pl.when(k == 0)
    def _init():
        acc_ref[...] = jnp.zeros_like(acc_ref)

    # adj block is (node_tile, edge_tile); contracting dim 0 of both operands
    # computes (adj_blk.T @ emb_blk) without materializing adj.T anywhere.
    adj_blk = adj_ref[...].astype(jnp.float32)
    acc_ref[...] += jax.lax.dot_general(
        adj_blk, emb_ref[...],
        dimension_numbers=(((0,), (0,)), ((), ())),
        preferred_element_type=jnp.float32)

    @pl.when(k == pl.num_programs(1) - 1)
    def _finalize():
        h = jnp.dot(acc_ref[...], wt_ref[...],
                    preferred_element_type=jnp.float32)
        out_ref[...] = _layernorm(h, g1_ref[...], b1_ref[...]).astype(out_ref.dtype)


# ---------------------------------------------------------------------------
# Stage 2:  out = LeakyReLU( LN2( adj @ lat1 ) )                 shape (N, H)
# grid = (N_tiles, E_tiles); axis 1 is the hyperedge-contraction axis.
# ---------------------------------------------------------------------------
def _stage2_kernel(leaky, adj_ref, lat1_ref, g2_ref, b2_ref, out_ref, acc_ref):
    k = pl.program_id(1)

    @pl.when(k == 0)
    def _init():
        acc_ref[...] = jnp.zeros_like(acc_ref)

    adj_blk = adj_ref[...].astype(jnp.float32)
    acc_ref[...] += jnp.dot(adj_blk, lat1_ref[...],
                            preferred_element_type=jnp.float32)

    @pl.when(k == pl.num_programs(1) - 1)
    def _finalize():
        y = _layernorm(acc_ref[...], g2_ref[...], b2_ref[...])
        out_ref[...] = jnp.where(y >= 0, y, leaky * y).astype(out_ref.dtype)


def hgnn_conv(adj, embeds, w, gamma1, beta1, gamma2, beta2, leaky,
              *, tile_n=256, tile_e=256, adj_dtype=jnp.bfloat16):
    """HGNNConv forward.

    adj:    (N, E) dense hypergraph incidence (torch.spmm done densely)
    embeds: (N, Din)
    w:      (H, Din) PyTorch Linear weight (bias=False)
    gamma*/beta*: (H,) LayerNorm affine params.

    adj_dtype=bf16 halves HBM traffic for the dominant operand and is exact
    for 0/1 incidence; pass jnp.float32 for weighted incidence matrices.
    """
    N, E = adj.shape
    _, Din = embeds.shape
    H = w.shape[0]

    tn, N_pad = _tile_and_pad(N, tile_n)
    te, E_pad = _tile_and_pad(E, tile_e)

    # Zero-pad up to tile multiples (zeros contribute nothing to either
    # contraction; padded output rows are sliced off at the end).
    adj_p = adj
    if (N_pad != N) or (E_pad != E):
        adj_p = jnp.pad(adj, ((0, N_pad - N), (0, E_pad - E)))
    adj_p = adj_p.astype(adj_dtype)
    emb_p = embeds if N_pad == N else jnp.pad(embeds, ((0, N_pad - N), (0, 0)))
    emb_p = emb_p.astype(jnp.float32)

    wt = w.T.astype(jnp.float32)                      # (Din, H) — tiny, one-off
    g1 = gamma1.reshape(1, H).astype(jnp.float32)
    b1 = beta1.reshape(1, H).astype(jnp.float32)
    g2 = gamma2.reshape(1, H).astype(jnp.float32)
    b2 = beta2.reshape(1, H).astype(jnp.float32)

    adj_bytes = int(adj_p.size) * jnp.dtype(adj_dtype).itemsize

    # ---- Stage 1: lat1 = LN1((adj.T @ embeds) @ W^T), shape (E_pad, H) ----
    cost1 = pl.CostEstimate(
        flops=2 * E_pad * N_pad * Din + 2 * E_pad * Din * H,
        transcendentals=E_pad,
        bytes_accessed=adj_bytes + N_pad * Din * 4 + Din * H * 4 + E_pad * H * 4,
    )
    lat1 = pl.pallas_call(
        _stage1_kernel,
        out_shape=jax.ShapeDtypeStruct((E_pad, H), jnp.float32),
        grid=(E_pad // te, N_pad // tn),
        in_specs=[
            pl.BlockSpec((tn, te), lambda i, k: (k, i)),     # adj (nodes, edges)
            pl.BlockSpec((tn, Din), lambda i, k: (k, 0)),    # embeds, streamed over k
            pl.BlockSpec((Din, H), lambda i, k: (0, 0)),     # W^T (resident)
            pl.BlockSpec((1, H), lambda i, k: (0, 0)),       # gamma1
            pl.BlockSpec((1, H), lambda i, k: (0, 0)),       # beta1
        ],
        out_specs=pl.BlockSpec((te, H), lambda i, k: (i, 0)),
        scratch_shapes=[pltpu.VMEM((te, Din), jnp.float32)],
        compiler_params=pltpu.CompilerParams(
            dimension_semantics=("parallel", "arbitrary"),
            vmem_limit_bytes=_VMEM_LIMIT),
        cost_estimate=cost1,
    )(adj_p, emb_p, wt, g1, b1)

    # ---- Stage 2: out = LeakyReLU(LN2(adj @ lat1)), shape (N_pad, H) ----
    cost2 = pl.CostEstimate(
        flops=2 * N_pad * E_pad * H,
        transcendentals=N_pad,
        bytes_accessed=adj_bytes + E_pad * H * 4 + N_pad * H * 4,
    )
    out = pl.pallas_call(
        functools.partial(_stage2_kernel, leaky),
        out_shape=jax.ShapeDtypeStruct((N_pad, H), jnp.float32),
        grid=(N_pad // tn, E_pad // te),
        in_specs=[
            pl.BlockSpec((tn, te), lambda i, k: (i, k)),     # adj
            pl.BlockSpec((te, H), lambda i, k: (k, 0)),      # lat1, streamed over k
            pl.BlockSpec((1, H), lambda i, k: (0, 0)),       # gamma2
            pl.BlockSpec((1, H), lambda i, k: (0, 0)),       # beta2
        ],
        out_specs=pl.BlockSpec((tn, H), lambda i, k: (i, 0)),
        scratch_shapes=[pltpu.VMEM((tn, H), jnp.float32)],
        compiler_params=pltpu.CompilerParams(
            dimension_semantics=("parallel", "arbitrary"),
            vmem_limit_bytes=_VMEM_LIMIT),
        cost_estimate=cost2,
    )(adj_p, lat1, g2, b2)

    return out[:N] if N_pad != N else out


def hgnn_conv_ref(adj, embeds, w, gamma1, beta1, gamma2, beta2, leaky):
    """Pure-JAX reference matching the PyTorch forward."""
    def ln(x, g, b):
        mean = jnp.mean(x, axis=-1, keepdims=True)
        var = jnp.mean((x - mean) ** 2, axis=-1, keepdims=True)
        return (x - mean) / jnp.sqrt(var + LN_EPS) * g + b

    lat1 = ln(jnp.dot(adj.T, embeds) @ w.T, gamma1, beta1)
    z = ln(jnp.dot(adj, lat1), gamma2, beta2)
    return jnp.where(z >= 0, z, leaky * z)


if __name__ == "__main__":
    # Small shapes: N nodes, E hyperedges, Din input features, H hyper_dim.
    N, E, Din, H = 16, 8, 32, 128
    leaky = 0.1

    key = jax.random.PRNGKey(0)
    k_adj, k_emb, k_w = jax.random.split(key, 3)

    # Sparse-ish 0/1 incidence matrix, kept dense (torch.spmm == dense matmul here).
    adj = (jax.random.uniform(k_adj, (N, E)) > 0.7).astype(jnp.float32)
    embeds = jax.random.normal(k_emb, (N, Din), dtype=jnp.float32)

    # nn.Linear(input_dim, hyper_dim, bias=False): weight shape (H, Din).
    bound = 1.0 / (Din ** 0.5)
    w = jax.random.uniform(k_w, (H, Din), minval=-bound, maxval=bound,
                           dtype=jnp.float32)
    # LayerNorm default affine init: weight=1, bias=0.
    gamma1 = jnp.ones((H,), jnp.float32)
    beta1 = jnp.zeros((H,), jnp.float32)
    gamma2 = jnp.ones((H,), jnp.float32)
    beta2 = jnp.zeros((H,), jnp.float32)

    out = hgnn_conv(adj, embeds, w, gamma1, beta1, gamma2, beta2, leaky)
    out = jax.block_until_ready(out)

    ref = hgnn_conv_ref(adj, embeds, w, gamma1, beta1, gamma2, beta2, leaky)
    assert out.shape == (N, H)
    assert jnp.allclose(out, ref, atol=1e-4, rtol=1e-4), "mismatch vs reference"

    print("KERNEL_OK")
</pallas_src>

<mosaic_0001>
module attributes {stable_mosaic.version = 11 : i64} {
  func.func @_stage1_kernel(%arg0: i32, %arg1: i32, %arg2: memref<128x128xbf16, #tpu.memory_space<vmem>>, %arg3: memref<128x32xf32, #tpu.memory_space<vmem>>, %arg4: memref<32x128xf32, #tpu.memory_space<vmem>>, %arg5: memref<1x128xf32, #tpu.memory_space<vmem>>, %arg6: memref<1x128xf32, #tpu.memory_space<vmem>>, %arg7: memref<128x128xf32, #tpu.memory_space<vmem>>, %arg8: memref<128x32xf32, #tpu.memory_space<vmem>>) attributes {dimension_semantics = [#tpu.dimension_semantics<parallel>, #tpu.dimension_semantics<arbitrary>], iteration_bounds = array<i64: 1, 1>, scalar_prefetch = 0 : i64, scratch_operands = 1 : i64, tpu.core_type = #tpu.core_type<tc>, window_params = [{transform_indices = @transform_0, window_bounds = array<i64: 128, 128>}, {transform_indices = @transform_1, window_bounds = array<i64: 128, 32>}, {pipeline_mode = #tpu.pipeline_mode<synchronous>, transform_indices = @transform_2, window_bounds = array<i64: 32, 128>}, {pipeline_mode = #tpu.pipeline_mode<synchronous>, transform_indices = @transform_3, window_bounds = array<i64: 1, 128>}, {pipeline_mode = #tpu.pipeline_mode<synchronous>, transform_indices = @transform_4, window_bounds = array<i64: 1, 128>}, {transform_indices = @transform_5, window_bounds = array<i64: 128, 128>}]} {
    %c0_i32 = arith.constant 0 : i32
    %0 = arith.cmpi eq, %arg1, %c0_i32 : i32
    %1 = arith.extui %0 : i1 to i32
    %c0_i32_0 = arith.constant 0 : i32
    %2 = arith.cmpi ne, %1, %c0_i32_0 : i32
    scf.if %2 {
      %cst_10 = arith.constant 0.000000e+00 : f32
      %13 = vector.broadcast %cst_10 : f32 to vector<128x32xf32>
      %c0_11 = arith.constant 0 : index
      %c0_12 = arith.constant 0 : index
      %14 = vector.load %arg8[%c0_11, %c0_12] : memref<128x32xf32, #tpu.memory_space<vmem>>, vector<128x32xf32>
      tpu.vector_store %arg8[%c0_11, %c0_12], %13 {strides = array<i32>} : memref<128x32xf32, #tpu.memory_space<vmem>>, vector<128x32xf32>,
    } else {
    }
    %c0 = arith.constant 0 : index
    %c0_1 = arith.constant 0 : index
    %3 = vector.load %arg2[%c0, %c0_1] : memref<128x128xbf16, #tpu.memory_space<vmem>>, vector<128x128xbf16>
    %4 = arith.extf %3 : vector<128x128xbf16> to vector<128x128xf32>
    %c0_2 = arith.constant 0 : index
    %c0_3 = arith.constant 0 : index
    %5 = vector.load %arg8[%c0_2, %c0_3] : memref<128x32xf32, #tpu.memory_space<vmem>>, vector<128x32xf32>
    %c0_4 = arith.constant 0 : index
    %c0_5 = arith.constant 0 : index
    %6 = vector.load %arg3[%c0_4, %c0_5] : memref<128x32xf32, #tpu.memory_space<vmem>>, vector<128x32xf32>
    %cst = arith.constant dense<0.000000e+00> : vector<128x32xf32>
    %7 = tpu.matmul %4, %6, %cst {dimension_numbers = #tpu.dot_dimension_numbers<[0], [0], [1], [1], [0, 1, 1, 1], [], []>} : vector<128x128xf32>, vector<128x32xf32>, vector<128x32xf32> -> vector<128x32xf32>
    %8 = arith.addf %5, %7 : vector<128x32xf32>
    %c0_6 = arith.constant 0 : index
    %c0_7 = arith.constant 0 : index
    %9 = vector.load %arg8[%c0_6, %c0_7] : memref<128x32xf32, #tpu.memory_space<vmem>>, vector<128x32xf32>
    tpu.vector_store %arg8[%c0_6, %c0_7], %8 {strides = array<i32>} : memref<128x32xf32, #tpu.memory_space<vmem>>, vector<128x32xf32>,
    %c0_i32_8 = arith.constant 0 : i32
    %10 = arith.cmpi eq, %arg1, %c0_i32_8 : i32
    %11 = arith.extui %10 : i1 to i32
    %c0_i32_9 = arith.constant 0 : i32
    %12 = arith.cmpi ne, %11, %c0_i32_9 : i32
    scf.if %12 {
      %c0_10 = arith.constant 0 : index
      %c0_11 = arith.constant 0 : index
      %13 = vector.load %arg8[%c0_10, %c0_11] : memref<128x32xf32, #tpu.memory_space<vmem>>, vector<128x32xf32>
      %c0_12 = arith.constant 0 : index
      %c0_13 = arith.constant 0 : index
      %14 = vector.load %arg4[%c0_12, %c0_13] : memref<32x128xf32, #tpu.memory_space<vmem>>, vector<32x128xf32>
      %cst_14 = arith.constant dense<0.000000e+00> : vector<128x128xf32>
      %15 = tpu.matmul %13, %14, %cst_14 {dimension_numbers = #tpu.dot_dimension_numbers<[1], [0], [0], [1], [0, 0, 1, 1], [], []>} : vector<128x32xf32>, vector<32x128xf32>, vector<128x128xf32> -> vector<128x128xf32>
      %c0_15 = arith.constant 0 : index
      %c0_16 = arith.constant 0 : index
      %16 = vector.load %arg5[%c0_15, %c0_16] : memref<1x128xf32, #tpu.memory_space<vmem>>, vector<1x128xf32>
      %c0_17 = arith.constant 0 : index
      %c0_18 = arith.constant 0 : index
      %17 = vector.load %arg6[%c0_17, %c0_18] : memref<1x128xf32, #tpu.memory_space<vmem>>, vector<1x128xf32>
      %cst_19 = arith.constant dense<0.000000e+00> : vector<128xf32>
      %18 = vector.multi_reduction <add>, %15, %cst_19 [1] : vector<128x128xf32> to vector<128xf32>
      %19 = vector.shape_cast %18 : vector<128xf32> to vector<128x1xf32>
      %cst_20 = arith.constant 1.280000e+02 : f32
      %20 = vector.broadcast %cst_20 : f32 to vector<128x1xf32>
      %21 = arith.divf %19, %20 : vector<128x1xf32>
      %22 = vector.broadcast %21 : vector<128x1xf32> to vector<128x128xf32>
      %23 = arith.subf %15, %22 : vector<128x128xf32>
      %24 = arith.mulf %23, %23 : vector<128x128xf32>
      %cst_21 = arith.constant dense<0.000000e+00> : vector<128xf32>
      %25 = vector.multi_reduction <add>, %24, %cst_21 [1] : vector<128x128xf32> to vector<128xf32>
      %26 = vector.shape_cast %25 : vector<128xf32> to vector<128x1xf32>
      %cst_22 = arith.constant 1.280000e+02 : f32
      %27 = vector.broadcast %cst_22 : f32 to vector<128x1xf32>
      %28 = arith.divf %26, %27 : vector<128x1xf32>
      %29 = vector.broadcast %21 : vector<128x1xf32> to vector<128x128xf32>
      %30 = arith.subf %15, %29 : vector<128x128xf32>
      %cst_23 = arith.constant 9.99999974E-6 : f32
      %31 = vector.broadcast %cst_23 : f32 to vector<128x1xf32>
      %32 = arith.addf %28, %31 : vector<128x1xf32>
      %33 = math.rsqrt %32 : vector<128x1xf32>
      %34 = vector.broadcast %33 : vector<128x1xf32> to vector<128x128xf32>
      %35 = arith.mulf %30, %34 : vector<128x128xf32>
      %36 = vector.broadcast %16 : vector<1x128xf32> to vector<128x128xf32>
      %37 = arith.mulf %35, %36 : vector<128x128xf32>
      %38 = vector.broadcast %17 : vector<1x128xf32> to vector<128x128xf32>
      %39 = arith.addf %37, %38 : vector<128x128xf32>
      %c0_24 = arith.constant 0 : index
      %c0_25 = arith.constant 0 : index
      %40 = vector.load %arg7[%c0_24, %c0_25] : memref<128x128xf32, #tpu.memory_space<vmem>>, vector<128x128xf32>
      tpu.vector_store %arg7[%c0_24, %c0_25], %39 {strides = array<i32>} : memref<128x128xf32, #tpu.memory_space<vmem>>, vector<128x128xf32>,
    } else {
    }
    return
  }
  func.func @transform_0(%arg0: i32, %arg1: i32) -> (i32, i32) {
    %c0_i32 = arith.constant 0 : i32
    return %arg1, %arg0 : i32, i32
  }
  func.func @transform_1(%arg0: i32, %arg1: i32) -> (i32, i32) {
    %c0_i32 = arith.constant 0 : i32
    %c0_i32_0 = arith.constant 0 : i32
    return %arg1, %c0_i32 : i32, i32
  }
  func.func @transform_2(%arg0: i32, %arg1: i32) -> (i32, i32) {
    %c0_i32 = arith.constant 0 : i32
    %c0_i32_0 = arith.constant 0 : i32
    %c0_i32_1 = arith.constant 0 : i32
    return %c0_i32, %c0_i32_0 : i32, i32
  }
  func.func @transform_3(%arg0: i32, %arg1: i32) -> (i32, i32) {
    %c0_i32 = arith.constant 0 : i32
    %c0_i32_0 = arith.constant 0 : i32
    %c0_i32_1 = arith.constant 0 : i32
    return %c0_i32, %c0_i32_0 : i32, i32
  }
  func.func @transform_4(%arg0: i32, %arg1: i32) -> (i32, i32) {
    %c0_i32 = arith.constant 0 : i32
    %c0_i32_0 = arith.constant 0 : i32
    %c0_i32_1 = arith.constant 0 : i32
    return %c0_i32, %c0_i32_0 : i32, i32
  }
  func.func @transform_5(%arg0: i32, %arg1: i32) -> (i32, i32) {
    %c0_i32 = arith.constant 0 : i32
    %c0_i32_0 = arith.constant 0 : i32
    return %arg0, %c0_i32 : i32, i32
  }
}

</mosaic_0001>

<llo_original>
// kernel: tpu_custom_call.1
$region0: #{tpu_custom_call.1}
  #allocation0 [shape = 'u32[]', space=smem, size = 0x4, offset = 0x4, fixed_abs, tag = 'smem constant byte address 0x4 - core index']
  #allocation1 [shape = 'u32[144,128]{1,0:T(1,128)}', space=vmem, size = 0x12000, scoped, tag = 'internal scratch']
  #allocation2 [shape = 'f32[128,32]{1,0:T(8,128)}', space=vmem, size = 0x10000, scoped, tag = 'scratch operand']
  %s0 = inlined_call_operand.vmem [shape: bf16[128,128], index: 0, kind: input, shape index: {}]
  %s1 = inlined_call_operand.vmem [shape: f32[128,32], index: 1, kind: input, shape index: {}]
  %s2 = inlined_call_operand.vmem [shape: f32[32,128], index: 2, kind: input, shape index: {}]
  %s3 = inlined_call_operand.vmem [shape: f32[1,128], index: 3, kind: input, shape index: {}]
  %s4 = inlined_call_operand.vmem [shape: f32[1,128], index: 4, kind: input, shape index: {}]
  %s5 = inlined_call_operand.hbm [shape: f32[128,128], index: 5, kind: output, shape index: {}]
  %s6 = sld [smem:[#allocation0]]
  $region38: #{tpu_custom_call.1} parent=0
    _
  %s8 = ssub.s32 1, %s6
  %s9 = scalar_select 0, %s8, %s6
  $region1: #{tpu_custom_call.1} parent=0
    #allocation3 [shape = 'u8[65536]{0}', space=vmem, size = 0x10000, scoped, tag = 'output window, operand 0, single buffered']
    #allocation4 [shape = 's32[1]{0}', space=sflag, size = 0x4, scoped, tag = 'scoped memory for tpu_custom_call.1']
    %10 = vsyncpa [#allocation4], 0
    // Predicated region
    $region2: #{tpu_custom_call.1} parent=1 // pred_check
      _
    $region3: #{tpu_custom_call.1} parent=1 // pred_check_branch
      %12 = sbr.rel (0) target = $region5
    $region4: #{tpu_custom_call.1} parent=1 // pred_region
      _
    $region5: #{tpu_custom_call.1} parent=1 // pred_fallthru
      _
    // Predicated region
    $region6: #{tpu_custom_call.1} parent=1 // pred_check
      _
    $region7: #{tpu_custom_call.1} parent=1 // pred_check_branch
      %14 = sbr.rel (0) target = $region9
    $region8: #{tpu_custom_call.1} parent=1 // pred_region
      _
    $region9: #{tpu_custom_call.1} parent=1 // pred_fallthru
      _
    // Predicated region
    $region10: #{tpu_custom_call.1} parent=1 // pred_check
      _
    $region11: #{tpu_custom_call.1} parent=1 // pred_check_branch
      %16 = sbr.rel (0) target = $region13
    $region12: #{tpu_custom_call.1} parent=1 // pred_region
      _
    $region13: #{tpu_custom_call.1} parent=1 // pred_fallthru
      _
    // Predicated region
    $region14: #{tpu_custom_call.1} parent=1 // pred_check
      _
    $region15: #{tpu_custom_call.1} parent=1 // pred_check_branch
      %18 = sbr.rel (0) target = $region17
    $region16: #{tpu_custom_call.1} parent=1 // pred_region
      _
    $region17: #{tpu_custom_call.1} parent=1 // pred_fallthru
      _
    // Predicated region
    $region18: #{tpu_custom_call.1} parent=1 // pred_check
      _
    $region19: #{tpu_custom_call.1} parent=1 // pred_check_branch
      %20 = sbr.rel (0) target = $region21
    $region20: #{tpu_custom_call.1} parent=1 // pred_region
      _
    $region21: #{tpu_custom_call.1} parent=1 // pred_fallthru
      _
    %p21 = scmp.eq.s32.totalorder 0, 0
    // Predicated region
    $region22: #{tpu_custom_call.1} parent=1 // pred_check
      %p22 = pneg %p21
    $region23: #{tpu_custom_call.1} parent=1 // pred_check_branch
      %24 = sbr.rel (%p22) target = $region25
    $region24: #{tpu_custom_call.1} parent=1 // pred_region
      %vm25 = vcmask 261120
      %26 = vst.msk [vmem:[#allocation2] sm:$0xff] %vm25, 0.0
      %27 = vst.msk [vmem:[#allocation2 + $0x8] sm:$0xff] %vm25, 0.0
      %28 = vst.msk [vmem:[#allocation2 + $0x10] sm:$0xff] %vm25, 0.0
      %29 = vst.msk [vmem:[#allocation2 + $0x18] sm:$0xff] %vm25, 0.0
      %30 = vst.msk [vmem:[#allocation2 + $0x20] sm:$0xff] %vm25, 0.0
      %31 = vst.msk [vmem:[#allocation2 + $0x28] sm:$0xff] %vm25, 0.0
      %32 = vst.msk [vmem:[#allocation2 + $0x30] sm:$0xff] %vm25, 0.0
      %33 = vst.msk [vmem:[#allocation2 + $0x38] sm:$0xff] %vm25, 0.0
      %34 = vst.msk [vmem:[#allocation2 + $0x40] sm:$0xff] %vm25, 0.0
      %35 = vst.msk [vmem:[#allocation2 + $0x48] sm:$0xff] %vm25, 0.0
      %36 = vst.msk [vmem:[#allocation2 + $0x50] sm:$0xff] %vm25, 0.0
      %37 = vst.msk [vmem:[#allocation2 + $0x58] sm:$0xff] %vm25, 0.0
      %38 = vst.msk [vmem:[#allocation2 + $0x60] sm:$0xff] %vm25, 0.0
      %39 = vst.msk [vmem:[#allocation2 + $0x68] sm:$0xff] %vm25, 0.0
      %40 = vst.msk [vmem:[#allocation2 + $0x70] sm:$0xff] %vm25, 0.0
      %41 = vst.msk [vmem:[#allocation2 + $0x78] sm:$0xff] %vm25, 0.0
    $region25: #{tpu_custom_call.1} parent=1 // pred_fallthru
      _
    %v42 = vld [vmem:[%s0] sm:$0xf]
    %v43 = vld [vmem:[%s0 + $0x4] sm:$0xf]
    %v44 = vld [vmem:[%s0 + $0x8] sm:$0xf]
    %v45 = vld [vmem:[%s0 + $0xc] sm:$0xf]
    %v46 = vld [vmem:[%s0 + $0x10] sm:$0xf]
    %v47 = vld [vmem:[%s0 + $0x14] sm:$0xf]
    %v48 = vld [vmem:[%s0 + $0x18] sm:$0xf]
    %v49 = vld [vmem:[%s0 + $0x1c] sm:$0xf]
    %v50 = vld [vmem:[%s0 + $0x20] sm:$0xf]
    %v51 = vld [vmem:[%s0 + $0x24] sm:$0xf]
    %v52 = vld [vmem:[%s0 + $0x28] sm:$0xf]
    %v53 = vld [vmem:[%s0 + $0x2c] sm:$0xf]
    %v54 = vld [vmem:[%s0 + $0x30] sm:$0xf]
    %v55 = vld [vmem:[%s0 + $0x34] sm:$0xf]
    %v56 = vld [vmem:[%s0 + $0x38] sm:$0xf]
    %v57 = vld [vmem:[%s0 + $0x3c] sm:$0xf]
    %v58 = vunpack.c.l.bf16 %v42
    %v59 = vunpack.c.l.bf16 %v43
    %v60 = vunpack.c.l.bf16 %v44
    %v61 = vunpack.c.l.bf16 %v45
    %v62 = vunpack.c.l.bf16 %v46
    %v63 = vunpack.c.l.bf16 %v47
    %v64 = vunpack.c.l.bf16 %v48
    %v65 = vunpack.c.l.bf16 %v49
    %v66 = vunpack.c.l.bf16 %v50
    %v67 = vunpack.c.l.bf16 %v51
    %v68 = vunpack.c.l.bf16 %v52
    %v69 = vunpack.c.l.bf16 %v53
    %v70 = vunpack.c.l.bf16 %v54
    %v71 = vunpack.c.l.bf16 %v55
    %v72 = vunpack.c.l.bf16 %v56
    %v73 = vunpack.c.l.bf16 %v57
    %v74 = vld [vmem:[#allocation2] sm:$0xff]
    %v75 = vld [vmem:[#allocation2 + $0x8] sm:$0xff]
    %v76 = vld [vmem:[#allocation2 + $0x10] sm:$0xff]
    %v77 = vld [vmem:[#allocation2 + $0x18] sm:$0xff]
    %v78 = vld [vmem:[#allocation2 + $0x20] sm:$0xff]
    %v79 = vld [vmem:[#allocation2 + $0x28] sm:$0xff]
    %v80 = vld [vmem:[#allocation2 + $0x30] sm:$0xff]
    %v81 = vld [vmem:[#allocation2 + $0x38] sm:$0xff]
    %v82 = vld [vmem:[#allocation2 + $0x40] sm:$0xff]
    %v83 = vld [vmem:[#allocation2 + $0x48] sm:$0xff]
    %v84 = vld [vmem:[#allocation2 + $0x50] sm:$0xff]
    %v85 = vld [vmem:[#allocation2 + $0x58] sm:$0xff]
    %v86 = vld [vmem:[#allocation2 + $0x60] sm:$0xff]
    %v87 = vld [vmem:[#allocation2 + $0x68] sm:$0xff]
    %v88 = vld [vmem:[#allocation2 + $0x70] sm:$0xff]
    %v89 = vld [vmem:[#allocation2 + $0x78] sm:$0xff]
    %v90 = vld [vmem:[%s1] sm:$0xff]
    %v91 = vld [vmem:[%s1 + $0x8] sm:$0xff]
    %v92 = vld [vmem:[%s1 + $0x10] sm:$0xff]
    %v93 = vld [vmem:[%s1 + $0x18] sm:$0xff]
    %v94 = vld [vmem:[%s1 + $0x20] sm:$0xff]
    %v95 = vld [vmem:[%s1 + $0x28] sm:$0xff]
    %v96 = vld [vmem:[%s1 + $0x30] sm:$0xff]
    %v97 = vld [vmem:[%s1 + $0x38] sm:$0xff]
    %v98 = vld [vmem:[%s1 + $0x40] sm:$0xff]
    %v99 = vld [vmem:[%s1 + $0x48] sm:$0xff]
    %v100 = vld [vmem:[%s1 + $0x50] sm:$0xff]
    %v101 = vld [vmem:[%s1 + $0x58] sm:$0xff]
    %v102 = vld [vmem:[%s1 + $0x60] sm:$0xff]
    %v103 = vld [vmem:[%s1 + $0x68] sm:$0xff]
    %v104 = vld [vmem:[%s1 + $0x70] sm:$0xff]
    %v105 = vld [vmem:[%s1 + $0x78] sm:$0xff]
    %106 = vxpose.xlu0.b32.start [1/16] %v58, 128
    %107 = vxpose.xlu0.b32.cont [2/16] %v59, 128
    %108 = vxpose.xlu0.b32.cont [3/16] %v60, 128
    %109 = vxpose.xlu0.b32.cont [4/16] %v61, 128
    %110 = vxpose.xlu0.b32.cont [5/16] %v62, 128
    %111 = vxpose.xlu0.b32.cont [6/16] %v63, 128
    %112 = vxpose.xlu0.b32.cont [7/16] %v64, 128
    %113 = vxpose.xlu0.b32.cont [8/16] %v65, 128
    %114 = vxpose.xlu0.b32.cont [9/16] %v66, 128
    %115 = vxpose.xlu0.b32.cont [10/16] %v67, 128
    %116 = vxpose.xlu0.b32.cont [11/16] %v68, 128
    %117 = vxpose.xlu0.b32.cont [12/16] %v69, 128
    %118 = vxpose.xlu0.b32.cont [13/16] %v70, 128
    %119 = vxpose.xlu0.b32.cont [14/16] %v71, 128
    %120 = vxpose.xlu0.b32.cont [15/16] %v72, 128
    %121 = vxpose.xlu0.b32.end [16/16] %v73, 128
    %v122 = vpop.trf.xlu0
    %v123 = vpop.trf.xlu0
    %v124 = vpop.trf.xlu0
    %v125 = vpop.trf.xlu0
    %v126 = vpop.trf.xlu0
    %v127 = vpop.trf.xlu0
    %v128 = vpop.trf.xlu0
    %v129 = vpop.trf.xlu0
    %v130 = vpop.trf.xlu0
    %v131 = vpop.trf.xlu0
    %v132 = vpop.trf.xlu0
    %v133 = vpop.trf.xlu0
    %v134 = vpop.trf.xlu0
    %v135 = vpop.trf.xlu0
    %v136 = vpop.trf.xlu0
    %v137 = vpop.trf.xlu0
    %138 = vmatprep.subr.mxu0 0.0
    %139 = vmatpush1.msra.mxu0 %v90
    %140 = vmatprep.subr.mxu0 0.0
    %141 = vmatpush1.msra.mxu0 %v91
    %142 = vmatprep.subr.mxu0 0.0
    %143 = vmatpush1.msra.mxu0 %v92
    %144 = vmatprep.subr.mxu0 0.0
    %145 = vmatpush1.msra.mxu0 %v93
    %146 = vmatprep.subr.mxu0 0.0
    %147 = vmatpush1.msra.mxu0 %v94
    %148 = vmatprep.subr.mxu0 0.0
    %149 = vmatpush1.msra.mxu0 %v95
    %150 = vmatprep.subr.mxu0 0.0
    %151 = vmatpush1.msra.mxu0 %v96
    %152 = vmatprep.subr.mxu0 0.0
    %153 = vmatpush1.msra.mxu0 %v97
    %154 = vmatprep.subr.mxu0 0.0
    %155 = vmatpush1.msra.mxu0 %v98
    %156 = vmatprep.subr.mxu0 0.0
    %157 = vmatpush1.msra.mxu0 %v99
    %158 = vmatprep.subr.mxu0 0.0
    %159 = vmatpush1.msra.mxu0 %v100
    %160 = vmatprep.subr.mxu0 0.0
    %161 = vmatpush1.msra.mxu0 %v101
    %162 = vmatprep.subr.mxu0 0.0
    %163 = vmatpush1.msra.mxu0 %v102
    %164 = vmatprep.subr.mxu0 0.0
    %165 = vmatpush1.msra.mxu0 %v103
    %166 = vmatprep.subr.mxu0 0.0
    %167 = vmatpush1.msra.mxu0 %v104
    %168 = vmatprep.subr.mxu0 0.0
    %169 = vmatpush1.msra.mxu0 %v105
    %170 = vmatprep.subr.mxu0 0.0
    %171 = vmatpush1.msra.mxu0 0.0
    %172 = vmatprep.subr.mxu0 0.0
    %173 = vmatpush1.msra.mxu0 0.0
    %174 = vmatprep.subr.mxu0 0.0
    %175 = vmatpush1.msra.mxu0 0.0
    %176 = vmatprep.subr.mxu0 0.0
    %177 = vmatpush1.msra.mxu0 0.0
    %178 = vmatprep.subr.mxu0 0.0
    %179 = vmatpush1.msra.mxu0 0.0
    %180 = vmatprep.subr.mxu0 0.0
    %181 = vmatpush1.msra.mxu0 0.0
    %182 = vmatprep.subr.mxu0 0.0
    %183 = vmatpush1.msra.mxu0 0.0
    %184 = vmatprep.subr.mxu0 0.0
    %185 = vmatpush1.msra.mxu0 0.0
    %186 = vmatprep.subr.mxu0 0.0
    %187 = vmatpush1.msra.mxu0 0.0
    %188 = vmatprep.subr.mxu0 0.0
    %189 = vmatpush1.msra.mxu0 0.0
    %190 = vmatprep.subr.mxu0 0.0
    %191 = vmatpush1.msra.mxu0 0.0
    %192 = vmatprep.subr.mxu0 0.0
    %193 = vmatpush1.msra.mxu0 0.0
    %194 = vmatprep.subr.mxu0 0.0
    %195 = vmatpush1.msra.mxu0 0.0
    %196 = vmatprep.subr.mxu0 0.0
    %197 = vmatpush1.msra.mxu0 0.0
    %198 = vmatprep.subr.mxu0 0.0
    %199 = vmatpush1.msra.mxu0 0.0
    %200 = vmatprep.subr.mxu0 0.0
    %201 = vmatpush1.msra.mxu0 0.0
    %202 = vmatprep.mubr.f32.mxu0 0.0
    %203 = vmatmul.mubr.f32.gmra.mrb[0].mxu0 %v122
    %v204 = vpop.f32.mrb[0].mxu0
    %v205 = vadd.f32 0.0, %v204
    %v206 = vpop.f32.mrb[0].mxu0
    %207 = vmatprep.mubr.f32.mxu0 0.0
    %208 = vmatmul.mubr.f32.gmra.mrb[0].mxu0 %v123
    %v209 = vpop.f32.mrb[0].mxu0
    %v210 = vadd.f32 0.0, %v209
    %v211 = vpop.f32.mrb[0].mxu0
    %212 = vmatprep.mubr.f32.mxu0 0.0
    %213 = vmatmul.mubr.f32.gmra.mrb[0].mxu0 %v124
    %v214 = vpop.f32.mrb[0].mxu0
    %v215 = vadd.f32 0.0, %v214
    %v216 = vpop.f32.mrb[0].mxu0
    %217 = vmatprep.mubr.f32.mxu0 0.0
    %218 = vmatmul.mubr.f32.gmra.mrb[0].mxu0 %v125
    %v219 = vpop.f32.mrb[0].mxu0
    %v220 = vadd.f32 0.0, %v219
    %v221 = vpop.f32.mrb[0].mxu0
    %222 = vmatprep.mubr.f32.mxu0 0.0
    %223 = vmatmul.mubr.f32.gmra.mrb[0].mxu0 %v126
    %v224 = vpop.f32.mrb[0].mxu0
    %v225 = vadd.f32 0.0, %v224
    %v226 = vpop.f32.mrb[0].mxu0
    %227 = vmatprep.mubr.f32.mxu0 0.0
    %228 = vmatmul.mubr.f32.gmra.mrb[0].mxu0 %v127
    %v229 = vpop.f32.mrb[0].mxu0
    %v230 = vadd.f32 0.0, %v229
    %v231 = vpop.f32.mrb[0].mxu0
    %232 = vmatprep.mubr.f32.mxu0 0.0
    %233 = vmatmul.mubr.f32.gmra.mrb[0].mxu0 %v128
    %v234 = vpop.f32.mrb[0].mxu0
    %v235 = vadd.f32 0.0, %v234
    %v236 = vpop.f32.mrb[0].mxu0
    %237 = vmatprep.mubr.f32.mxu0 0.0
    %238 = vmatmul.mubr.f32.gmra.mrb[0].mxu0 %v129
    %v239 = vpop.f32.mrb[0].mxu0
    %v240 = vadd.f32 0.0, %v239
    %v241 = vpop.f32.mrb[0].mxu0
    %242 = vmatprep.mubr.f32.mxu0 0.0
    %243 = vmatmul.mubr.f32.gmra.mrb[0].mxu0 %v130
    %v244 = vpop.f32.mrb[0].mxu0
    %v245 = vadd.f32 0.0, %v244
    %v246 = vpop.f32.mrb[0].mxu0
    %247 = vmatprep.mubr.f32.mxu0 0.0
    %248 = vmatmul.mubr.f32.gmra.mrb[0].mxu0 %v131
    %v249 = vpop.f32.mrb[0].mxu0
    %v250 = vadd.f32 0.0, %v249
    %v251 = vpop.f32.mrb[0].mxu0
    %252 = vmatprep.mubr.f32.mxu0 0.0
    %253 = vmatmul.mubr.f32.gmra.mrb[0].mxu0 %v132
    %v254 = vpop.f32.mrb[0].mxu0
    %v255 = vadd.f32 0.0, %v254
    %v256 = vpop.f32.mrb[0].mxu0
    %257 = vmatprep.mubr.f32.mxu0 0.0
    %258 = vmatmul.mubr.f32.gmra.mrb[0].mxu0 %v133
    %v259 = vpop.f32.mrb[0].mxu0
    %v260 = vadd.f32 0.0, %v259
    %v261 = vpop.f32.mrb[0].mxu0
    %262 = vmatprep.mubr.f32.mxu0 0.0
    %263 = vmatmul.mubr.f32.gmra.mrb[0].mxu0 %v134
    %v264 = vpop.f32.mrb[0].mxu0
    %v265 = vadd.f32 0.0, %v264
    %v266 = vpop.f32.mrb[0].mxu0
    %267 = vmatprep.mubr.f32.mxu0 0.0
    %268 = vmatmul.mubr.f32.gmra.mrb[0].mxu0 %v135
    %v269 = vpop.f32.mrb[0].mxu0
    %v270 = vadd.f32 0.0, %v269
    %v271 = vpop.f32.mrb[0].mxu0
    %272 = vmatprep.mubr.f32.mxu0 0.0
    %273 = vmatmul.mubr.f32.gmra.mrb[0].mxu0 %v136
    %v274 = vpop.f32.mrb[0].mxu0
    %v275 = vadd.f32 0.0, %v274
    %v276 = vpop.f32.mrb[0].mxu0
    %277 = vmatprep.mubr.f32.mxu0 0.0
    %278 = vmatmul.mubr.f32.gmra.mrb[0].mxu0 %v137
    %v279 = vpop.f32.mrb[0].mxu0
    %v280 = vadd.f32 0.0, %v279
    %v281 = vpop.f32.mrb[0].mxu0
    %282 = vdwg.mxu0
    %v283 = vadd.f32 %v74, %v205
    %v284 = vadd.f32 %v75, %v210
    %v285 = vadd.f32 %v76, %v215
    %v286 = vadd.f32 %v77, %v220
    %v287 = vadd.f32 %v78, %v225
    %v288 = vadd.f32 %v79, %v230
    %v289 = vadd.f32 %v80, %v235
    %v290 = vadd.f32 %v81, %v240
    %v291 = vadd.f32 %v82, %v245
    %v292 = vadd.f32 %v83, %v250
    %v293 = vadd.f32 %v84, %v255
    %v294 = vadd.f32 %v85, %v260
    %v295 = vadd.f32 %v86, %v265
    %v296 = vadd.f32 %v87, %v270
    %v297 = vadd.f32 %v88, %v275
    %v298 = vadd.f32 %v89, %v280
    %vm299 = vcmask 261120
    %300 = vst.msk [vmem:[#allocation2] sm:$0xff] %vm299, %v283
    %301 = vst.msk [vmem:[#allocation2 + $0x8] sm:$0xff] %vm299, %v284
    %302 = vst.msk [vmem:[#allocation2 + $0x10] sm:$0xff] %vm299, %v285
    %303 = vst.msk [vmem:[#allocation2 + $0x18] sm:$0xff] %vm299, %v286
    %304 = vst.msk [vmem:[#allocation2 + $0x20] sm:$0xff] %vm299, %v287
    %305 = vst.msk [vmem:[#allocation2 + $0x28] sm:$0xff] %vm299, %v288
    %306 = vst.msk [vmem:[#allocation2 + $0x30] sm:$0xff] %vm299, %v289
    %307 = vst.msk [vmem:[#allocation2 + $0x38] sm:$0xff] %vm299, %v290
    %308 = vst.msk [vmem:[#allocation2 + $0x40] sm:$0xff] %vm299, %v291
    %309 = vst.msk [vmem:[#allocation2 + $0x48] sm:$0xff] %vm299, %v292
    %310 = vst.msk [vmem:[#allocation2 + $0x50] sm:$0xff] %vm299, %v293
    %311 = vst.msk [vmem:[#allocation2 + $0x58] sm:$0xff] %vm299, %v294
    %312 = vst.msk [vmem:[#allocation2 + $0x60] sm:$0xff] %vm299, %v295
    %313 = vst.msk [vmem:[#allocation2 + $0x68] sm:$0xff] %vm299, %v296
    %314 = vst.msk [vmem:[#allocation2 + $0x70] sm:$0xff] %vm299, %v297
    %315 = vst.msk [vmem:[#allocation2 + $0x78] sm:$0xff] %vm299, %v298
    // Predicated region
    $region26: #{tpu_custom_call.1} parent=1 // pred_check
      %p316 = pneg %p21
    $region27: #{tpu_custom_call.1} parent=1 // pred_check_branch
      %318 = sbr.rel (%p316) target = $region29
    $region28: #{tpu_custom_call.1} parent=1 // pred_region
      %v319 = vld [vmem:[#allocation2] sm:$0xff]
      %v320 = vld [vmem:[#allocation2 + $0x8] sm:$0xff]
      %v321 = vld [vmem:[#allocation2 + $0x10] sm:$0xff]
      %v322 = vld [vmem:[#allocation2 + $0x18] sm:$0xff]
      %v323 = vld [vmem:[#allocation2 + $0x20] sm:$0xff]
      %v324 = vld [vmem:[#allocation2 + $0x28] sm:$0xff]
      %v325 = vld [vmem:[#allocation2 + $0x30] sm:$0xff]
      %v326 = vld [vmem:[#allocation2 + $0x38] sm:$0xff]
      %v327 = vld [vmem:[#allocation2 + $0x40] sm:$0xff]
      %v328 = vld [vmem:[#allocation2 + $0x48] sm:$0xff]
      %v329 = vld [vmem:[#allocation2 + $0x50] sm:$0xff]
      %v330 = vld [vmem:[#allocation2 + $0x58] sm:$0xff]
      %v331 = vld [vmem:[#allocation2 + $0x60] sm:$0xff]
      %v332 = vld [vmem:[#allocation2 + $0x68] sm:$0xff]
      %v333 = vld [vmem:[#allocation2 + $0x70] sm:$0xff]
      %v334 = vld [vmem:[#allocation2 + $0x78] sm:$0xff]
      %v335 = vld [vmem:[%s2] sm:$0xff]
      %v336 = vld [vmem:[%s2 + $0x8] sm:$0xff]
      %v337 = vld [vmem:[%s2 + $0x10] sm:$0xff]
      %v338 = vld [vmem:[%s2 + $0x18] sm:$0xff]
      %v340 = vsel %vm299, %v319, 0
      %v343 = vsel %vm299, %v320, 0
      %v346 = vsel %vm299, %v321, 0
      %v349 = vsel %vm299, %v322, 0
      %v352 = vsel %vm299, %v323, 0
      %v355 = vsel %vm299, %v324, 0
      %v358 = vsel %vm299, %v325, 0
      %v361 = vsel %vm299, %v326, 0
      %v364 = vsel %vm299, %v327, 0
      %v367 = vsel %vm299, %v328, 0
      %v370 = vsel %vm299, %v329, 0
      %v373 = vsel %vm299, %v330, 0
      %v376 = vsel %vm299, %v331, 0
      %v379 = vsel %vm299, %v332, 0
      %v382 = vsel %vm299, %v333, 0
      %v385 = vsel %vm299, %v334, 0
      %387 = vmatprep.subr.mxu0 0.0
      %388 = vmatpush1.msra.mxu0 %v335
      %389 = vmatprep.subr.mxu0 0.0
      %390 = vmatpush1.msra.mxu0 %v336
      %391 = vmatprep.subr.mxu0 0.0
      %392 = vmatpush1.msra.mxu0 %v337
      %393 = vmatprep.subr.mxu0 0.0
      %394 = vmatpush1.msra.mxu0 %v338
      %395 = vmatprep.subr.mxu0 0.0
      %396 = vmatpush1.msra.mxu0 0.0
      %397 = vmatprep.subr.mxu0 0.0
      %398 = vmatpush1.msra.mxu0 0.0
      %399 = vmatprep.subr.mxu0 0.0
      %400 = vmatpush1.msra.mxu0 0.0
      %401 = vmatprep.subr.mxu0 0.0
      %402 = vmatpush1.msra.mxu0 0.0
      %403 = vmatprep.subr.mxu0 0.0
      %404 = vmatpush1.msra.mxu0 0.0
      %405 = vmatprep.subr.mxu0 0.0
      %406 = vmatpush1.msra.mxu0 0.0
      %407 = vmatprep.subr.mxu0 0.0
      %408 = vmatpush1.msra.mxu0 0.0
      %409 = vmatprep.subr.mxu0 0.0
      %410 = vmatpush1.msra.mxu0 0.0
      %411 = vmatprep.subr.mxu0 0.0
      %412 = vmatpush1.msra.mxu0 0.0
      %413 = vmatprep.subr.mxu0 0.0
      %414 = vmatpush1.msra.mxu0 0.0
      %415 = vmatprep.subr.mxu0 0.0
      %416 = vmatpush1.msra.mxu0 0.0
      %417 = vmatprep.subr.mxu0 0.0
      %418 = vmatpush1.msra.mxu0 0.0
      %419 = vmatprep.subr.mxu0 0.0
      %420 = vmatpush1.msra.mxu0 0.0
      %421 = vmatprep.subr.mxu0 0.0
      %422 = vmatpush1.msra.mxu0 0.0
      %423 = vmatprep.subr.mxu0 0.0
      %424 = vmatpush1.msra.mxu0 0.0
      %425 = vmatprep.subr.mxu0 0.0
      %426 = vmatpush1.msra.mxu0 0.0
      %427 = vmatprep.subr.mxu0 0.0
      %428 = vmatpush1.msra.mxu0 0.0
      %429 = vmatprep.subr.mxu0 0.0
      %430 = vmatpush1.msra.mxu0 0.0
      %431 = vmatprep.subr.mxu0 0.0
      %432 = vmatpush1.msra.mxu0 0.0
      %433 = vmatprep.subr.mxu0 0.0
      %434 = vmatpush1.msra.mxu0 0.0
      %435 = vmatprep.subr.mxu0 0.0
      %436 = vmatpush1.msra.mxu0 0.0
      %437 = vmatprep.subr.mxu0 0.0
      %438 = vmatpush1.msra.mxu0 0.0
      %439 = vmatprep.subr.mxu0 0.0
      %440 = vmatpush1.msra.mxu0 0.0
      %441 = vmatprep.subr.mxu0 0.0
      %442 = vmatpush1.msra.mxu0 0.0
      %443 = vmatprep.subr.mxu0 0.0
      %444 = vmatpush1.msra.mxu0 0.0
      %445 = vmatprep.subr.mxu0 0.0
      %446 = vmatpush1.msra.mxu0 0.0
      %447 = vmatprep.subr.mxu0 0.0
      %448 = vmatpush1.msra.mxu0 0.0
      %449 = vmatprep.subr.mxu0 0.0
      %450 = vmatpush1.msra.mxu0 0.0
      %451 = vmatprep.mubr.f32.mxu0 0.0
      %452 = vmatmul.mubr.f32.gmra.mrb[0].mxu0 %v340
      %v453 = vpop.f32.mrb[0].mxu0
      %v454 = vadd.f32 0.0, %v453
      %v455 = vpop.f32.mrb[0].mxu0
      %456 = vmatprep.mubr.f32.mxu0 0.0
      %457 = vmatmul.mubr.f32.gmra.mrb[0].mxu0 %v343
      %v458 = vpop.f32.mrb[0].mxu0
      %v459 = vadd.f32 0.0, %v458
      %v460 = vpop.f32.mrb[0].mxu0
      %461 = vmatprep.mubr.f32.mxu0 0.0
      %462 = vmatmul.mubr.f32.gmra.mrb[0].mxu0 %v346
      %v463 = vpop.f32.mrb[0].mxu0
      %v464 = vadd.f32 0.0, %v463
      %v465 = vpop.f32.mrb[0].mxu0
      %466 = vmatprep.mubr.f32.mxu0 0.0
      %467 = vmatmul.mubr.f32.gmra.mrb[0].mxu0 %v349
      %v468 = vpop.f32.mrb[0].mxu0
      %v469 = vadd.f32 0.0, %v468
      %v470 = vpop.f32.mrb[0].mxu0
      %471 = vmatprep.mubr.f32.mxu0 0.0
      %472 = vmatmul.mubr.f32.gmra.mrb[0].mxu0 %v352
      %v473 = vpop.f32.mrb[0].mxu0
      %v474 = vadd.f32 0.0, %v473
      %v475 = vpop.f32.mrb[0].mxu0
      %476 = vmatprep.mubr.f32.mxu0 0.0
      %477 = vmatmul.mubr.f32.gmra.mrb[0].mxu0 %v355
      %v478 = vpop.f32.mrb[0].mxu0
      %v479 = vadd.f32 0.0, %v478
      %v480 = vpop.f32.mrb[0].mxu0
      %481 = vmatprep.mubr.f32.mxu0 0.0
      %482 = vmatmul.mubr.f32.gmra.mrb[0].mxu0 %v358
      %v483 = vpop.f32.mrb[0].mxu0
      %v484 = vadd.f32 0.0, %v483
      %v485 = vpop.f32.mrb[0].mxu0
      %486 = vmatprep.mubr.f32.mxu0 0.0
      %487 = vmatmul.mubr.f32.gmra.mrb[0].mxu0 %v361
      %v488 = vpop.f32.mrb[0].mxu0
      %v489 = vadd.f32 0.0, %v488
      %v490 = vpop.f32.mrb[0].mxu0
      %491 = vmatprep.mubr.f32.mxu0 0.0
      %492 = vmatmul.mubr.f32.gmra.mrb[0].mxu0 %v364
      %v493 = vpop.f32.mrb[0].mxu0
      %v494 = vadd.f32 0.0, %v493
      %v495 = vpop.f32.mrb[0].mxu0
      %496 = vmatprep.mubr.f32.mxu0 0.0
      %497 = vmatmul.mubr.f32.gmra.mrb[0].mxu0 %v367
      %v498 = vpop.f32.mrb[0].mxu0
      %v499 = vadd.f32 0.0, %v498
      %v500 = vpop.f32.mrb[0].mxu0
      %501 = vmatprep.mubr.f32.mxu0 0.0
      %502 = vmatmul.mubr.f32.gmra.mrb[0].mxu0 %v370
      %v503 = vpop.f32.mrb[0].mxu0
      %v504 = vadd.f32 0.0, %v503
      %v505 = vpop.f32.mrb[0].mxu0
      %506 = vmatprep.mubr.f32.mxu0 0.0
      %507 = vmatmul.mubr.f32.gmra.mrb[0].mxu0 %v373
      %v508 = vpop.f32.mrb[0].mxu0
      %v509 = vadd.f32 0.0, %v508
      %v510 = vpop.f32.mrb[0].mxu0
      %511 = vmatprep.mubr.f32.mxu0 0.0
      %512 = vmatmul.mubr.f32.gmra.mrb[0].mxu0 %v376
      %v513 = vpop.f32.mrb[0].mxu0
      %v514 = vadd.f32 0.0, %v513
      %v515 = vpop.f32.mrb[0].mxu0
      %516 = vmatprep.mubr.f32.mxu0 0.0
      %517 = vmatmul.mubr.f32.gmra.mrb[0].mxu0 %v379
      %v518 = vpop.f32.mrb[0].mxu0
      %v519 = vadd.f32 0.0, %v518
      %v520 = vpop.f32.mrb[0].mxu0
      %521 = vmatprep.mubr.f32.mxu0 0.0
      %522 = vmatmul.mubr.f32.gmra.mrb[0].mxu0 %v382
      %v523 = vpop.f32.mrb[0].mxu0
      %v524 = vadd.f32 0.0, %v523
      %v525 = vpop.f32.mrb[0].mxu0
      %526 = vmatprep.mubr.f32.mxu0 0.0
      %527 = vmatmul.mubr.f32.gmra.mrb[0].mxu0 %v385
      %v528 = vpop.f32.mrb[0].mxu0
      %v529 = vadd.f32 0.0, %v528
      %v530 = vpop.f32.mrb[0].mxu0
      %531 = vdwg.mxu0
      %v532 = vld [vmem:[%s3] sm:$0x1]
      %v533 = vld [vmem:[%s4] sm:$0x1]
      %534 = vadd.xlane.f32.xlu0 %v454
      %v535 = vpop.xlane.xlu0 %534
      %536 = vadd.xlane.f32.xlu0 %v459
      %v537 = vpop.xlane.xlu0 %536
      %538 = vadd.xlane.f32.xlu0 %v464
      %v539 = vpop.xlane.xlu0 %538
      %540 = vadd.xlane.f32.xlu0 %v469
      %v541 = vpop.xlane.xlu0 %540
      %542 = vadd.xlane.f32.xlu0 %v474
      %v543 = vpop.xlane.xlu0 %542
      %544 = vadd.xlane.f32.xlu0 %v479
      %v545 = vpop.xlane.xlu0 %544
      %546 = vadd.xlane.f32.xlu0 %v484
      %v547 = vpop.xlane.xlu0 %546
      %548 = vadd.xlane.f32.xlu0 %v489
      %v549 = vpop.xlane.xlu0 %548
      %550 = vadd.xlane.f32.xlu0 %v494
      %v551 = vpop.xlane.xlu0 %550
      %552 = vadd.xlane.f32.xlu0 %v499
      %v553 = vpop.xlane.xlu0 %552
      %554 = vadd.xlane.f32.xlu0 %v504
      %v555 = vpop.xlane.xlu0 %554
      %556 = vadd.xlane.f32.xlu0 %v509
      %v557 = vpop.xlane.xlu0 %556
      %558 = vadd.xlane.f32.xlu0 %v514
      %v559 = vpop.xlane.xlu0 %558
      %560 = vadd.xlane.f32.xlu0 %v519
      %v561 = vpop.xlane.xlu0 %560
      %562 = vadd.xlane.f32.xlu0 %v524
      %v563 = vpop.xlane.xlu0 %562
      %564 = vadd.xlane.f32.xlu0 %v529
      %v565 = vpop.xlane.xlu0 %564
      %v566 = vrcp.pop 128.0
      %v567 = vmul.f32 %v535, %v566
      %v568 = vmul.f32 %v537, %v566
      %v569 = vmul.f32 %v539, %v566
      %v570 = vmul.f32 %v541, %v566
      %v571 = vmul.f32 %v543, %v566
      %v572 = vmul.f32 %v545, %v566
      %v573 = vmul.f32 %v547, %v566
      %v574 = vmul.f32 %v549, %v566
      %v575 = vmul.f32 %v551, %v566
      %v576 = vmul.f32 %v553, %v566
      %v577 = vmul.f32 %v555, %v566
      %v578 = vmul.f32 %v557, %v566
      %v579 = vmul.f32 %v559, %v566
      %v580 = vmul.f32 %v561, %v566
      %v581 = vmul.f32 %v563, %v566
      %v582 = vmul.f32 %v565, %v566
      %v583 = vsub.f32 %v454, %v567
      %v584 = vsub.f32 %v459, %v568
      %v585 = vsub.f32 %v464, %v569
      %v586 = vsub.f32 %v469, %v570
      %v587 = vsub.f32 %v474, %v571
      %v588 = vsub.f32 %v479, %v572
      %v589 = vsub.f32 %v484, %v573
      %v590 = vsub.f32 %v489, %v574
      %v591 = vsub.f32 %v494, %v575
      %v592 = vsub.f32 %v499, %v576
      %v593 = vsub.f32 %v504, %v577
      %v594 = vsub.f32 %v509, %v578
      %v595 = vsub.f32 %v514, %v579
      %v596 = vsub.f32 %v519, %v580
      %v597 = vsub.f32 %v524, %v581
      %v598 = vsub.f32 %v529, %v582
      %v599 = vmul.f32 %v583, %v583
      %v600 = vmul.f32 %v584, %v584
      %v601 = vmul.f32 %v585, %v585
      %v602 = vmul.f32 %v586, %v586
      %v603 = vmul.f32 %v587, %v587
      %v604 = vmul.f32 %v588, %v588
      %v605 = vmul.f32 %v589, %v589
      %v606 = vmul.f32 %v590, %v590
      %v607 = vmul.f32 %v591, %v591
      %v608 = vmul.f32 %v592, %v592
      %v609 = vmul.f32 %v593, %v593
      %v610 = vmul.f32 %v594, %v594
      %v611 = vmul.f32 %v595, %v595
      %v612 = vmul.f32 %v596, %v596
      %v613 = vmul.f32 %v597, %v597
      %v614 = vmul.f32 %v598, %v598
      %615 = vadd.xlane.f32.xlu0 %v599
      %v616 = vpop.xlane.xlu0 %615
      %617 = vadd.xlane.f32.xlu0 %v600
      %v618 = vpop.xlane.xlu0 %617
      %619 = vadd.xlane.f32.xlu0 %v601
      %v620 = vpop.xlane.xlu0 %619
      %621 = vadd.xlane.f32.xlu0 %v602
      %v622 = vpop.xlane.xlu0 %621
      %623 = vadd.xlane.f32.xlu0 %v603
      %v624 = vpop.xlane.xlu0 %623
      %625 = vadd.xlane.f32.xlu0 %v604
      %v626 = vpop.xlane.xlu0 %625
      %627 = vadd.xlane.f32.xlu0 %v605
      %v628 = vpop.xlane.xlu0 %627
      %629 = vadd.xlane.f32.xlu0 %v606
      %v630 = vpop.xlane.xlu0 %629
      %631 = vadd.xlane.f32.xlu0 %v607
      %v632 = vpop.xlane.xlu0 %631
      %633 = vadd.xlane.f32.xlu0 %v608
      %v634 = vpop.xlane.xlu0 %633
      %635 = vadd.xlane.f32.xlu0 %v609
      %v636 = vpop.xlane.xlu0 %635
      %637 = vadd.xlane.f32.xlu0 %v610
      %v638 = vpop.xlane.xlu0 %637
      %639 = vadd.xlane.f32.xlu0 %v611
      %v640 = vpop.xlane.xlu0 %639
      %641 = vadd.xlane.f32.xlu0 %v612
      %v642 = vpop.xlane.xlu0 %641
      %643 = vadd.xlane.f32.xlu0 %v613
      %v644 = vpop.xlane.xlu0 %643
      %645 = vadd.xlane.f32.xlu0 %v614
      %v646 = vpop.xlane.xlu0 %645
      %v647 = vmul.f32 %v616, %v566
      %v648 = vmul.f32 %v618, %v566
      %v649 = vmul.f32 %v620, %v566
      %v650 = vmul.f32 %v622, %v566
      %v651 = vmul.f32 %v624, %v566
      %v652 = vmul.f32 %v626, %v566
      %v653 = vmul.f32 %v628, %v566
      %v654 = vmul.f32 %v630, %v566
      %v655 = vmul.f32 %v632, %v566
      %v656 = vmul.f32 %v634, %v566
      %v657 = vmul.f32 %v636, %v566
      %v658 = vmul.f32 %v638, %v566
      %v659 = vmul.f32 %v640, %v566
      %v660 = vmul.f32 %v642, %v566
      %v661 = vmul.f32 %v644, %v566
      %v662 = vmul.f32 %v646, %v566
      %v663 = vadd.f32 %v647, 1e-05
      %v664 = vadd.f32 %v648, 1e-05
      %v665 = vadd.f32 %v649, 1e-05
      %v666 = vadd.f32 %v650, 1e-05
      %v667 = vadd.f32 %v651, 1e-05
      %v668 = vadd.f32 %v652, 1e-05
      %v669 = vadd.f32 %v653, 1e-05
      %v670 = vadd.f32 %v654, 1e-05
      %v671 = vadd.f32 %v655, 1e-05
      %v672 = vadd.f32 %v656, 1e-05
      %v673 = vadd.f32 %v657, 1e-05
      %v674 = vadd.f32 %v658, 1e-05
      %v675 = vadd.f32 %v659, 1e-05
      %v676 = vadd.f32 %v660, 1e-05
      %v677 = vadd.f32 %v661, 1e-05
      %v678 = vadd.f32 %v662, 1e-05
      %v679 = vrsqrt.pop %v663
      %v680 = vrsqrt.pop %v664
      %v681 = vrsqrt.pop %v665
      %v682 = vrsqrt.pop %v666
      %v683 = vrsqrt.pop %v667
      %v684 = vrsqrt.pop %v668
      %v685 = vrsqrt.pop %v669
      %v686 = vrsqrt.pop %v670
      %v687 = vrsqrt.pop %v671
      %v688 = vrsqrt.pop %v672
      %v689 = vrsqrt.pop %v673
      %v690 = vrsqrt.pop %v674
      %v691 = vrsqrt.pop %v675
      %v692 = vrsqrt.pop %v676
      %v693 = vrsqrt.pop %v677
      %v694 = vrsqrt.pop %v678
      %v695 = vmul.f32 %v583, %v679
      %v696 = vmul.f32 %v584, %v680
      %v697 = vmul.f32 %v585, %v681
      %v698 = vmul.f32 %v586, %v682
      %v699 = vmul.f32 %v587, %v683
      %v700 = vmul.f32 %v588, %v684
      %v701 = vmul.f32 %v589, %v685
      %v702 = vmul.f32 %v590, %v686
      %v703 = vmul.f32 %v591, %v687
      %v704 = vmul.f32 %v592, %v688
      %v705 = vmul.f32 %v593, %v689
      %v706 = vmul.f32 %v594, %v690
      %v707 = vmul.f32 %v595, %v691
      %v708 = vmul.f32 %v596, %v692
      %v709 = vmul.f32 %v597, %v693
      %v710 = vmul.f32 %v598, %v694
      %v712 = vlaneseq
      %v713 = vshrl.u32 %v712, 7
      %v714 = vsub.s32 0, %v713
      %v715 = vrot.slane %v532, %v714
      %v717 = vmul.f32 %v695, %v715
      %v718 = vmul.f32 %v696, %v715
      %v719 = vmul.f32 %v697, %v715
      %v720 = vmul.f32 %v698, %v715
      %v721 = vmul.f32 %v699, %v715
      %v722 = vmul.f32 %v700, %v715
      %v723 = vmul.f32 %v701, %v715
      %v724 = vmul.f32 %v702, %v715
      %v725 = vmul.f32 %v703, %v715
      %v726 = vmul.f32 %v704, %v715
      %v727 = vmul.f32 %v705, %v715
      %v728 = vmul.f32 %v706, %v715
      %v729 = vmul.f32 %v707, %v715
      %v730 = vmul.f32 %v708, %v715
      %v731 = vmul.f32 %v709, %v715
      %v732 = vmul.f32 %v710, %v715
      %v734 = vlaneseq
      %v735 = vshrl.u32 %v734, 7
      %v736 = vsub.s32 0, %v735
      %v737 = vrot.slane %v533, %v736
      %v739 = vadd.f32 %v717, %v737
      %v740 = vadd.f32 %v718, %v737
      %v741 = vadd.f32 %v719, %v737
      %v742 = vadd.f32 %v720, %v737
      %v743 = vadd.f32 %v721, %v737
      %v744 = vadd.f32 %v722, %v737
      %v745 = vadd.f32 %v723, %v737
      %v746 = vadd.f32 %v724, %v737
      %v747 = vadd.f32 %v725, %v737
      %v748 = vadd.f32 %v726, %v737
      %v749 = vadd.f32 %v727, %v737
      %v750 = vadd.f32 %v728, %v737
      %v751 = vadd.f32 %v729, %v737
      %v752 = vadd.f32 %v730, %v737
      %v753 = vadd.f32 %v731, %v737
      %v754 = vadd.f32 %v732, %v737
      %755 = vst [vmem:[#allocation3] sm:$0xff] %v739
      %756 = vst [vmem:[#allocation3 + $0x8] sm:$0xff] %v740
      %757 = vst [vmem:[#allocation3 + $0x10] sm:$0xff] %v741
      %758 = vst [vmem:[#allocation3 + $0x18] sm:$0xff] %v742
      %759 = vst [vmem:[#allocation3 + $0x20] sm:$0xff] %v743
      %760 = vst [vmem:[#allocation3 + $0x28] sm:$0xff] %v744
      %761 = vst [vmem:[#allocation3 + $0x30] sm:$0xff] %v745
      %762 = vst [vmem:[#allocation3 + $0x38] sm:$0xff] %v746
      %763 = vst [vmem:[#allocation3 + $0x40] sm:$0xff] %v747
      %764 = vst [vmem:[#allocation3 + $0x48] sm:$0xff] %v748
      %765 = vst [vmem:[#allocation3 + $0x50] sm:$0xff] %v749
      %766 = vst [vmem:[#allocation3 + $0x58] sm:$0xff] %v750
      %767 = vst [vmem:[#allocation3 + $0x60] sm:$0xff] %v751
      %768 = vst [vmem:[#allocation3 + $0x68] sm:$0xff] %v752
      %769 = vst [vmem:[#allocation3 + $0x70] sm:$0xff] %v753
      %770 = vst [vmem:[#allocation3 + $0x78] sm:$0xff] %v754
    $region29: #{tpu_custom_call.1} parent=1 // pred_fallthru
      _
    // Predicated region
    $region30: #{tpu_custom_call.1} parent=1 // pred_check
      _
    $region31: #{tpu_custom_call.1} parent=1 // pred_check_branch
      %772 = sbr.rel (0) target = $region33
    $region32: #{tpu_custom_call.1} parent=1 // pred_region
      %s774 = ssub.s32 2048, 2048
      %775 = vsyncadd [#allocation4], %s774
      %s776 = sshll.u32 [#allocation3], 4
      %s777 = int_to_ptr.vmem [resolvable:$true] %s776
      %782 = dma.vmem_to_hbm [thread:$0]  %s777, 2048, %s5, [#allocation4], 128, 128, 8
    $region33: #{tpu_custom_call.1} parent=1 // pred_fallthru
      _
    // Predicated region
    $region34: #{tpu_custom_call.1} parent=1 // pred_check
      _
    $region35: #{tpu_custom_call.1} parent=1 // pred_check_branch
      %784 = sbr.rel (0) target = $region37
    $region36: #{tpu_custom_call.1} parent=1 // pred_region
      %785 = dma.done [#allocation4], 2048
    $region37: #{tpu_custom_call.1} parent=1 // pred_fallthru
      _
    %786 = vsyncpa [#allocation4], 1

</llo_original>
